<compile_context>
chip_gen: v5e
topology: v5e:2x2
jax: 0.10.0
libtpu: 0.0.40
codegen_flags: <defaults>
</compile_context>

<pallas_src>
import jax
import jax.numpy as jnp
from jax.experimental import pallas as pl
from jax.experimental.pallas import tpu as pltpu


def _round_up(x: int, m: int) -> int:
    return (x + m - 1) // m * m


# ---------------------------------------------------------------------------
# Kernels
# ---------------------------------------------------------------------------
def _svd_linear_kernel_bias(x_ref, vt_ref, ut_ref, b_ref, o_ref):
    # x_ref : (tm, in)        VMEM  (one M-tile of activations)
    # vt_ref: (in, rank_p)    VMEM  (V.T, resident across grid)
    # ut_ref: (rank_p, out)   VMEM  (U.T, resident across grid)
    # b_ref : (1, out)        VMEM  (bias, resident)
    # o_ref : (tm, out)       VMEM
    x = x_ref[...]
    if x.dtype != vt_ref.dtype:
        x = x.astype(vt_ref.dtype)
    y = jnp.dot(x, vt_ref[...], preferred_element_type=jnp.float32)   # (tm, rank_p)
    if y.dtype != ut_ref.dtype:
        y = y.astype(ut_ref.dtype)
    z = jnp.dot(y, ut_ref[...], preferred_element_type=jnp.float32)   # (tm, out)
    z = z + b_ref[...].astype(jnp.float32)
    o_ref[...] = z.astype(o_ref.dtype)


def _svd_linear_kernel_nobias(x_ref, vt_ref, ut_ref, o_ref):
    x = x_ref[...]
    if x.dtype != vt_ref.dtype:
        x = x.astype(vt_ref.dtype)
    y = jnp.dot(x, vt_ref[...], preferred_element_type=jnp.float32)
    if y.dtype != ut_ref.dtype:
        y = y.astype(ut_ref.dtype)
    z = jnp.dot(y, ut_ref[...], preferred_element_type=jnp.float32)
    o_ref[...] = z.astype(o_ref.dtype)


# ---------------------------------------------------------------------------
# Wrapper
# ---------------------------------------------------------------------------
def svd_linear(inp, U, V, bias=None, *, block_m: int = 512, vmem_limit_bytes=None):
    """Pallas equivalent of SVDLinear.forward.

    inp : (..., in_features)
    U   : (out_features, rank)
    V   : (rank, in_features)
    bias: (out_features,) or None
    returns (..., out_features), dtype == inp.dtype
    """
    *lead, in_features = inp.shape
    out_features, rank = U.shape
    assert V.shape == (rank, in_features), (V.shape, rank, in_features)

    x_dtype = inp.dtype
    # Never downcast stored weights; only upcast if activations are wider.
    w_dtype = jnp.promote_types(x_dtype, jnp.promote_types(U.dtype, V.dtype))
    x_item = jnp.dtype(x_dtype).itemsize
    w_item = jnp.dtype(w_dtype).itemsize

    M = 1
    for d in lead:
        M *= d
    x2d = inp.reshape(M, in_features)

    # --- Weights: one-off transpose into canonical (K, N) MXU layout;
    #     pad the rank dim to a lane-dense multiple of 128 (zeros are exact).
    rank_p = _round_up(rank, 128)
    vt = V.T.astype(w_dtype)                       # (in, rank)
    ut = U.T.astype(w_dtype)                       # (rank, out)
    if rank_p != rank:
        vt = jnp.pad(vt, ((0, 0), (0, rank_p - rank)))      # (in, rank_p)
        ut = jnp.pad(ut, ((0, rank_p - rank), (0, 0)))       # (rank_p, out)

    has_bias = bias is not None
    if has_bias:
        b2d = bias.reshape(1, out_features)

    # --- Balanced M tiling; ragged last tile handled by Pallas (masked store),
    #     no activation padding.
    if M <= block_m:
        tm = M                                    # single tile, full-dim block
    else:
        n_tiles = -(-M // block_m)
        tm = min(_round_up(-(-M // n_tiles), 8), M)

    # --- Fit the double-buffered tiles + resident weights into VMEM.
    def _vmem_bytes(t):
        b = 2 * t * in_features * x_item          # x tile (double-buffered)
        b += 2 * t * out_features * x_item        # out tile (double-buffered)
        b += 2 * in_features * rank_p * w_item    # Vt (resident, 2 bufs by default)
        b += 2 * rank_p * out_features * w_item   # Ut
        if has_bias:
            b += 2 * out_features * w_item
        b += 4 * t * (rank_p + out_features)      # f32 intermediates
        return b

    try:
        vmem_cap = int(pltpu.get_tpu_info().vmem_capacity_bytes)
    except Exception:
        vmem_cap = 64 * 1024 * 1024               # conservative (v7x per-TC)
    budget = int(vmem_cap * 0.85)
    while tm > 8 and _vmem_bytes(tm) > budget:
        tm = max(8, _round_up((tm + 1) // 2, 8))

    if vmem_limit_bytes is None:
        vmem_limit_bytes = min(
            vmem_cap, max(32 << 20, int(_vmem_bytes(tm) * 1.25) + (2 << 20)))

    grid_m = (M + tm - 1) // tm

    x_spec = pl.BlockSpec((tm, in_features), lambda i: (i, 0))
    vt_spec = pl.BlockSpec((in_features, rank_p), lambda i: (0, 0))
    ut_spec = pl.BlockSpec((rank_p, out_features), lambda i: (0, 0))
    o_spec = pl.BlockSpec((tm, out_features), lambda i: (i, 0))

    if has_bias:
        kernel = _svd_linear_kernel_bias
        in_specs = [x_spec, vt_spec, ut_spec,
                    pl.BlockSpec((1, out_features), lambda i: (0, 0))]
        args = (x2d, vt, ut, b2d)
    else:
        kernel = _svd_linear_kernel_nobias
        in_specs = [x_spec, vt_spec, ut_spec]
        args = (x2d, vt, ut)

    cost = pl.CostEstimate(
        flops=2 * M * rank * (in_features + out_features),
        transcendentals=0,
        bytes_accessed=(M * in_features * x_item
                        + M * out_features * x_item
                        + in_features * rank * w_item
                        + rank * out_features * w_item
                        + (out_features * w_item if has_bias else 0)),
    )

    out2d = pl.pallas_call(
        kernel,
        out_shape=jax.ShapeDtypeStruct((M, out_features), x_dtype),
        grid_spec=pl.GridSpec(
            grid=(grid_m,),
            in_specs=in_specs,
            out_specs=o_spec,
        ),
        compiler_params=pltpu.CompilerParams(
            dimension_semantics=("parallel",),
            vmem_limit_bytes=int(vmem_limit_bytes),
        ),
        cost_estimate=cost,
    )(*args)

    return out2d.reshape(*lead, out_features)


if __name__ == "__main__":
    key = jax.random.PRNGKey(0)
    k_x, k_u, k_v, k_b, k_x2 = jax.random.split(key, 5)

    batch, seq = 2, 8
    in_features = 32
    out_features = 32
    rank = 8  # truncation rank

    x = jax.random.normal(k_x, (batch, seq, in_features), dtype=jnp.float32)
    U = jax.random.normal(k_u, (out_features, rank), dtype=jnp.float32) * 0.1
    V = jax.random.normal(k_v, (rank, in_features), dtype=jnp.float32) * 0.1
    bias = jax.random.normal(k_b, (out_features,), dtype=jnp.float32) * 0.01

    # With bias (matches PyTorch: x @ V.T @ U.T + bias)
    out = svd_linear(x, U, V, bias)
    jax.block_until_ready(out)
    ref = x @ V.T @ U.T + bias
    assert out.shape == (batch, seq, out_features)
    assert jnp.allclose(out, ref, atol=1e-4, rtol=1e-4)

    # Bias-free path (ALinear constructed with bias=None)
    out_nb = svd_linear(x, U, V, None)
    jax.block_until_ready(out_nb)
    assert jnp.allclose(out_nb, x @ V.T @ U.T, atol=1e-4, rtol=1e-4)

    # Ragged-M path: M = 15 with block_m=8 -> two tiles, masked ragged tail.
    x2 = jax.random.normal(k_x2, (3, 5, in_features), dtype=jnp.float32)
    out2 = svd_linear(x2, U, V, bias, block_m=8)
    jax.block_until_ready(out2)
    ref2 = x2 @ V.T @ U.T + bias
    assert out2.shape == (3, 5, out_features)
    assert jnp.allclose(out2, ref2, atol=1e-4, rtol=1e-4)

    print("KERNEL_OK")
</pallas_src>

<mosaic_0001>
module attributes {stable_mosaic.version = 11 : i64} {
  func.func @_svd_linear_kernel_bias(%arg0: i32, %arg1: memref<16x32xf32, #tpu.memory_space<vmem>>, %arg2: memref<32x128xf32, #tpu.memory_space<vmem>>, %arg3: memref<128x32xf32, #tpu.memory_space<vmem>>, %arg4: memref<1x32xf32, #tpu.memory_space<vmem>>, %arg5: memref<16x32xf32, #tpu.memory_space<vmem>>) attributes {dimension_semantics = [#tpu.dimension_semantics<parallel>], iteration_bounds = array<i64: 1>, scalar_prefetch = 0 : i64, scratch_operands = 0 : i64, tpu.core_type = #tpu.core_type<tc>, window_params = [{transform_indices = @transform_0, window_bounds = array<i64: 16, 32>}, {pipeline_mode = #tpu.pipeline_mode<synchronous>, transform_indices = @transform_1, window_bounds = array<i64: 32, 128>}, {pipeline_mode = #tpu.pipeline_mode<synchronous>, transform_indices = @transform_2, window_bounds = array<i64: 128, 32>}, {pipeline_mode = #tpu.pipeline_mode<synchronous>, transform_indices = @transform_3, window_bounds = array<i64: 1, 32>}, {transform_indices = @transform_4, window_bounds = array<i64: 16, 32>}]} {
    %c0 = arith.constant 0 : index
    %c0_0 = arith.constant 0 : index
    %0 = vector.load %arg1[%c0, %c0_0] : memref<16x32xf32, #tpu.memory_space<vmem>>, vector<16x32xf32>
    %c0_1 = arith.constant 0 : index
    %c0_2 = arith.constant 0 : index
    %1 = vector.load %arg2[%c0_1, %c0_2] : memref<32x128xf32, #tpu.memory_space<vmem>>, vector<32x128xf32>
    %cst = arith.constant dense<0.000000e+00> : vector<16x128xf32>
    %2 = tpu.matmul %0, %1, %cst {dimension_numbers = #tpu.dot_dimension_numbers<[1], [0], [0], [1], [0, 0, 1, 1], [], []>} : vector<16x32xf32>, vector<32x128xf32>, vector<16x128xf32> -> vector<16x128xf32>
    %c0_3 = arith.constant 0 : index
    %c0_4 = arith.constant 0 : index
    %3 = vector.load %arg3[%c0_3, %c0_4] : memref<128x32xf32, #tpu.memory_space<vmem>>, vector<128x32xf32>
    %cst_5 = arith.constant dense<0.000000e+00> : vector<16x32xf32>
    %4 = tpu.matmul %2, %3, %cst_5 {dimension_numbers = #tpu.dot_dimension_numbers<[1], [0], [0], [1], [0, 0, 1, 1], [], []>} : vector<16x128xf32>, vector<128x32xf32>, vector<16x32xf32> -> vector<16x32xf32>
    %c0_6 = arith.constant 0 : index
    %c0_7 = arith.constant 0 : index
    %5 = vector.load %arg4[%c0_6, %c0_7] : memref<1x32xf32, #tpu.memory_space<vmem>>, vector<1x32xf32>
    %6 = vector.broadcast %5 : vector<1x32xf32> to vector<16x32xf32>
    %7 = arith.addf %4, %6 : vector<16x32xf32>
    %c0_8 = arith.constant 0 : index
    %c0_9 = arith.constant 0 : index
    %8 = vector.load %arg5[%c0_8, %c0_9] : memref<16x32xf32, #tpu.memory_space<vmem>>, vector<16x32xf32>
    tpu.vector_store %arg5[%c0_8, %c0_9], %7 {strides = array<i32>} : memref<16x32xf32, #tpu.memory_space<vmem>>, vector<16x32xf32>,
    return
  }
  func.func @transform_0(%arg0: i32) -> (i32, i32) {
    %c0_i32 = arith.constant 0 : i32
    %c0_i32_0 = arith.constant 0 : i32
    return %arg0, %c0_i32 : i32, i32
  }
  func.func @transform_1(%arg0: i32) -> (i32, i32) {
    %c0_i32 = arith.constant 0 : i32
    %c0_i32_0 = arith.constant 0 : i32
    %c0_i32_1 = arith.constant 0 : i32
    return %c0_i32, %c0_i32_0 : i32, i32
  }
  func.func @transform_2(%arg0: i32) -> (i32, i32) {
    %c0_i32 = arith.constant 0 : i32
    %c0_i32_0 = arith.constant 0 : i32
    %c0_i32_1 = arith.constant 0 : i32
    return %c0_i32, %c0_i32_0 : i32, i32
  }
  func.func @transform_3(%arg0: i32) -> (i32, i32) {
    %c0_i32 = arith.constant 0 : i32
    %c0_i32_0 = arith.constant 0 : i32
    %c0_i32_1 = arith.constant 0 : i32
    return %c0_i32, %c0_i32_0 : i32, i32
  }
  func.func @transform_4(%arg0: i32) -> (i32, i32) {
    %c0_i32 = arith.constant 0 : i32
    %c0_i32_0 = arith.constant 0 : i32
    return %arg0, %c0_i32 : i32, i32
  }
}

</mosaic_0001>

<llo_original>
// kernel: tpu_custom_call.1
$region0: #{tpu_custom_call.1}
  #allocation0 [shape = 'u32[]', space=smem, size = 0x4, offset = 0x4, fixed_abs, tag = 'smem constant byte address 0x4 - core index']
  #allocation1 [shape = 'u32[72,128]{1,0:T(1,128)}', space=vmem, size = 0x9000, scoped, tag = 'internal scratch']
  %s0 = inlined_call_operand.vmem [shape: f32[16,32], index: 0, kind: input, shape index: {}]
  %s1 = inlined_call_operand.vmem [shape: f32[32,128], index: 1, kind: input, shape index: {}]
  %s2 = inlined_call_operand.vmem [shape: f32[128,32], index: 2, kind: input, shape index: {}]
  %s3 = inlined_call_operand.vmem [shape: f32[1,32], index: 3, kind: input, shape index: {}]
  %s4 = inlined_call_operand.hbm [shape: f32[16,32], index: 4, kind: output, shape index: {}]
  %s5 = sld [smem:[#allocation0]]
  $region26: #{tpu_custom_call.1} parent=0
    _
  %s7 = ssub.s32 1, %s5
  %s8 = scalar_select 0, %s7, %s5
  $region1: #{tpu_custom_call.1} parent=0
    #allocation2 [shape = 'u8[8192]{0}', space=vmem, size = 0x2000, scoped, tag = 'output window, operand 0, single buffered']
    #allocation3 [shape = 's32[1]{0}', space=sflag, size = 0x4, scoped, tag = 'scoped memory for tpu_custom_call.1']
    %9 = vsyncpa [#allocation3], 0
    // Predicated region
    $region2: #{tpu_custom_call.1} parent=1 // pred_check
      _
    $region3: #{tpu_custom_call.1} parent=1 // pred_check_branch
      %11 = sbr.rel (0) target = $region5
    $region4: #{tpu_custom_call.1} parent=1 // pred_region
      _
    $region5: #{tpu_custom_call.1} parent=1 // pred_fallthru
      _
    // Predicated region
    $region6: #{tpu_custom_call.1} parent=1 // pred_check
      _
    $region7: #{tpu_custom_call.1} parent=1 // pred_check_branch
      %13 = sbr.rel (0) target = $region9
    $region8: #{tpu_custom_call.1} parent=1 // pred_region
      _
    $region9: #{tpu_custom_call.1} parent=1 // pred_fallthru
      _
    // Predicated region
    $region10: #{tpu_custom_call.1} parent=1 // pred_check
      _
    $region11: #{tpu_custom_call.1} parent=1 // pred_check_branch
      %15 = sbr.rel (0) target = $region13
    $region12: #{tpu_custom_call.1} parent=1 // pred_region
      _
    $region13: #{tpu_custom_call.1} parent=1 // pred_fallthru
      _
    // Predicated region
    $region14: #{tpu_custom_call.1} parent=1 // pred_check
      _
    $region15: #{tpu_custom_call.1} parent=1 // pred_check_branch
      %17 = sbr.rel (0) target = $region17
    $region16: #{tpu_custom_call.1} parent=1 // pred_region
      _
    $region17: #{tpu_custom_call.1} parent=1 // pred_fallthru
      _
    %v18 = vld [vmem:[%s0] sm:$0xff]
    %v19 = vld [vmem:[%s0 + $0x8] sm:$0xff]
    %v20 = vld [vmem:[%s1] sm:$0xff]
    %v21 = vld [vmem:[%s1 + $0x8] sm:$0xff]
    %v22 = vld [vmem:[%s1 + $0x10] sm:$0xff]
    %v23 = vld [vmem:[%s1 + $0x18] sm:$0xff]
    %vm24 = vcmask 261120
    %v26 = vsel %vm24, %v18, 0
    %v29 = vsel %vm24, %v19, 0
    %31 = vmatpush.msra.mxu0 0.0
    %32 = vmatpush.msra.mxu0 0.0
    %33 = vmatpush.msra.mxu0 0.0
    %34 = vmatpush.msra.mxu0 0.0
    %35 = vmatpush.msra.mxu0 0.0
    %36 = vmatpush.msra.mxu0 0.0
    %37 = vmatpush.msra.mxu0 0.0
    %38 = vmatpush.msra.mxu0 0.0
    %39 = vmatpush.msra.mxu0 0.0
    %40 = vmatpush.msra.mxu0 0.0
    %41 = vmatpush.msra.mxu0 0.0
    %42 = vmatpush.msra.mxu0 0.0
    %43 = vmatpush.msra.mxu0 %v23
    %44 = vmatpush.msra.mxu0 %v22
    %45 = vmatpush.msra.mxu0 %v21
    %46 = vmatpush.msra.mxu0 %v20
    %47 = vmatmul.f32.gmra.mxu0 %v26
    %v48 = vpop.f32.mrf.mxu0
    %v49 = vadd.f32 0.0, %v48
    %50 = vmatmul.f32.gmra.mxu0 %v29
    %v51 = vpop.f32.mrf.mxu0
    %v52 = vadd.f32 0.0, %v51
    %53 = vdwg.mxu0
    %v54 = vld [vmem:[%s2] sm:$0xff]
    %v55 = vld [vmem:[%s2 + $0x8] sm:$0xff]
    %v56 = vld [vmem:[%s2 + $0x10] sm:$0xff]
    %v57 = vld [vmem:[%s2 + $0x18] sm:$0xff]
    %v58 = vld [vmem:[%s2 + $0x20] sm:$0xff]
    %v59 = vld [vmem:[%s2 + $0x28] sm:$0xff]
    %v60 = vld [vmem:[%s2 + $0x30] sm:$0xff]
    %v61 = vld [vmem:[%s2 + $0x38] sm:$0xff]
    %v62 = vld [vmem:[%s2 + $0x40] sm:$0xff]
    %v63 = vld [vmem:[%s2 + $0x48] sm:$0xff]
    %v64 = vld [vmem:[%s2 + $0x50] sm:$0xff]
    %v65 = vld [vmem:[%s2 + $0x58] sm:$0xff]
    %v66 = vld [vmem:[%s2 + $0x60] sm:$0xff]
    %v67 = vld [vmem:[%s2 + $0x68] sm:$0xff]
    %v68 = vld [vmem:[%s2 + $0x70] sm:$0xff]
    %v69 = vld [vmem:[%s2 + $0x78] sm:$0xff]
    %v70 = vld [vmem:[%s3] sm:$0x1]
    %v72 = vperm.slane %v70, 0
    %74 = vmatpush.msra.mxu0 %v69
    %75 = vmatpush.msra.mxu0 %v68
    %76 = vmatpush.msra.mxu0 %v67
    %77 = vmatpush.msra.mxu0 %v66
    %78 = vmatpush.msra.mxu0 %v65
    %79 = vmatpush.msra.mxu0 %v64
    %80 = vmatpush.msra.mxu0 %v63
    %81 = vmatpush.msra.mxu0 %v62
    %82 = vmatpush.msra.mxu0 %v61
    %83 = vmatpush.msra.mxu0 %v60
    %84 = vmatpush.msra.mxu0 %v59
    %85 = vmatpush.msra.mxu0 %v58
    %86 = vmatpush.msra.mxu0 %v57
    %87 = vmatpush.msra.mxu0 %v56
    %88 = vmatpush.msra.mxu0 %v55
    %89 = vmatpush.msra.mxu0 %v54
    %90 = vmatmul.f32.gmra.mxu0 %v49
    %v91 = vpop.f32.mrf.mxu0
    %v92 = vadd.f32 %v72, %v91
    %93 = vmatmul.f32.gmra.mxu0 %v52
    %v94 = vpop.f32.mrf.mxu0
    %v95 = vadd.f32 %v72, %v94
    %96 = vdwg.mxu0
    %97 = vst.msk [vmem:[#allocation2] sm:$0xff] %vm24, %v92
    %98 = vst.msk [vmem:[#allocation2 + $0x8] sm:$0xff] %vm24, %v95
    // Predicated region
    $region18: #{tpu_custom_call.1} parent=1 // pred_check
      _
    $region19: #{tpu_custom_call.1} parent=1 // pred_check_branch
      %100 = sbr.rel (0) target = $region21
    $region20: #{tpu_custom_call.1} parent=1 // pred_region
      %102 = vsyncadd [#allocation3], 0
      %s103 = sshll.u32 [#allocation2], 4
      %s104 = int_to_ptr.vmem [resolvable:$true] %s103
      %s105 = sshll.u32 %s4, 4
      %s106 = int_to_ptr.hbm [resolvable:$true] %s105
      %111 = dma.vmem_to_hbm [thread:$0]  %s104, 256, %s106, [#allocation3], 128, 128, 8
    $region21: #{tpu_custom_call.1} parent=1 // pred_fallthru
      _
    // Predicated region
    $region22: #{tpu_custom_call.1} parent=1 // pred_check
      _
    $region23: #{tpu_custom_call.1} parent=1 // pred_check_branch
      %113 = sbr.rel (0) target = $region25
    $region24: #{tpu_custom_call.1} parent=1 // pred_region
      %115 = dma.done [#allocation3], 256
    $region25: #{tpu_custom_call.1} parent=1 // pred_fallthru
      _
    %116 = vsyncpa [#allocation3], 1

</llo_original>
